<compile_context>
chip_gen: v7x
topology: tpu7x:2x2x1
jax: 0.10.0
libtpu: 0.0.40
codegen_flags: <defaults>
</compile_context>

<pallas_src>
import functools

import jax
import jax.numpy as jnp
import numpy as np
from jax.experimental import pallas as pl
from jax.experimental.pallas import tpu as pltpu


def _round_up(x: int, m: int) -> int:
    return ((x + m - 1) // m) * m


def _rope_kernel(pos_ref, inv_freq_ref, cos_ref, sin_ref, *, scaling: float):
    """One row-tile of rotary cos/sin.

    pos_ref      : (rows, 1)       float32    flattened position ids
    inv_freq_ref : (1, half)       float32    inverse frequencies (resident)
    cos_ref      : (rows, 2*half)  out dtype
    sin_ref      : (rows, 2*half)  out dtype
    """
    pos = pos_ref[...]                       # (rows, 1)   f32
    inv = inv_freq_ref[...]                  # (1, half)   f32

    # VPU broadcast multiply (no MXU): angles in float32.
    freqs = pos * inv                        # (rows, half)

    cos_h = jnp.cos(freqs)                   # EUP, half width
    sin_h = jnp.sin(freqs)
    if scaling != 1.0:
        cos_h = cos_h * scaling
        sin_h = sin_h * scaling

    # emb = concat([freqs, freqs], -1) -> duplicate along lanes, cast, one store.
    cos_ref[...] = jnp.concatenate([cos_h, cos_h], axis=-1).astype(cos_ref.dtype)
    sin_ref[...] = jnp.concatenate([sin_h, sin_h], axis=-1).astype(sin_ref.dtype)


def qwen2_rotary_embedding(x, position_ids, inv_freq, *,
                           attention_scaling: float = 1.0,
                           block_rows: int | None = None):
    """Mirror of Qwen2RotaryEmbedding.forward(x, position_ids) -> (cos, sin).

    x            : only its dtype is used (as in the PyTorch module)
    position_ids : (B, S) int32/int64
    inv_freq     : (D/2,) float32
    returns (cos, sin), each of shape (B, S, D) in x.dtype.
    """
    out_dtype = x.dtype
    B, S = position_ids.shape
    half = inv_freq.shape[-1]
    D = 2 * half
    R = B * S

    # Flatten (B, S) -> rows; f32 positions (matches the .float() in PyTorch).
    pos = position_ids.reshape(R, 1).astype(jnp.float32)
    inv2d = inv_freq.reshape(1, half).astype(jnp.float32)

    if block_rows is None:
        # Target <= ~1 MiB per (f32-intermediate) output block; min 256 rows.
        block_rows = max(256, min(2048, (1 << 20) // max(D * 4, 1)))
        block_rows = _round_up(block_rows, 8)

    # Row tiles must be a multiple of 8 sublanes; pad rows so the grid is exact.
    block_rows = min(block_rows, _round_up(R, 8))
    r_pad = _round_up(R, block_rows)
    if r_pad != R:
        pos = jnp.pad(pos, ((0, r_pad - R), (0, 0)))
    grid = (r_pad // block_rows,)

    kernel = functools.partial(_rope_kernel, scaling=float(attention_scaling))

    cos, sin = pl.pallas_call(
        kernel,
        out_shape=(
            jax.ShapeDtypeStruct((r_pad, D), out_dtype),
            jax.ShapeDtypeStruct((r_pad, D), out_dtype),
        ),
        grid_spec=pltpu.PrefetchScalarGridSpec(
            num_scalar_prefetch=0,
            grid=grid,
            in_specs=[
                pl.BlockSpec((block_rows, 1), lambda i: (i, 0)),   # positions
                pl.BlockSpec((1, half), lambda i: (0, 0)),         # inv_freq (resident)
            ],
            out_specs=[
                pl.BlockSpec((block_rows, D), lambda i: (i, 0)),   # cos
                pl.BlockSpec((block_rows, D), lambda i: (i, 0)),   # sin
            ],
        ),
        compiler_params=pltpu.CompilerParams(
            dimension_semantics=("parallel",),
        ),
    )(pos, inv2d)

    cos = cos[:R].reshape(B, S, D)
    sin = sin[:R].reshape(B, S, D)
    return cos, sin


def _reference(x, position_ids, inv_freq, attention_scaling=1.0):
    """Pure-JAX mirror of the PyTorch forward (float32 math, cast at the end)."""
    pos = position_ids.astype(jnp.float32)                       # (B, S)
    freqs = pos[:, :, None] * inv_freq[None, None, :]            # (B, S, D/2)
    emb = jnp.concatenate([freqs, freqs], axis=-1)               # (B, S, D)
    cos = jnp.cos(emb) * attention_scaling
    sin = jnp.sin(emb) * attention_scaling
    return cos.astype(x.dtype), sin.astype(x.dtype)


if __name__ == "__main__":
    # Small, deterministic shapes.
    B, S, head_dim, hidden = 2, 8, 32, 64
    base = 10000.0
    attention_scaling = 1.0   # 'default' rope_type

    key = jax.random.PRNGKey(0)
    kx, kp = jax.random.split(key)

    # x only supplies the output dtype (as in the PyTorch module).
    x = jax.random.normal(kx, (B, S, hidden), dtype=jnp.float32)
    position_ids = jax.random.randint(kp, (B, S), 0, 2048, dtype=jnp.int32)

    # inv_freq exactly as ROPE_INIT_FUNCTIONS['default'] builds it.
    inv_freq = 1.0 / (base ** (jnp.arange(0, head_dim, 2, dtype=jnp.float32) / head_dim))

    cos, sin = qwen2_rotary_embedding(
        x, position_ids, inv_freq, attention_scaling=attention_scaling)
    cos, sin = jax.block_until_ready((cos, sin))

    cos_ref, sin_ref = _reference(x, position_ids, inv_freq, attention_scaling)
    np.testing.assert_allclose(np.asarray(cos), np.asarray(cos_ref), rtol=1e-5, atol=1e-5)
    np.testing.assert_allclose(np.asarray(sin), np.asarray(sin_ref), rtol=1e-5, atol=1e-5)

    # TODO(synk): dynamic-NTK rope ('dynamic' rope_type) recomputes inv_freq on
    # the host in PyTorch; that control flow stays in the Python wrapper.
    print("KERNEL_OK")
</pallas_src>

<mosaic_0001>
module attributes {stable_mosaic.version = 11 : i64} {
  func.func @_rope_kernel(%arg0: i32, %arg1: memref<16x1xf32, #tpu.memory_space<vmem>>, %arg2: memref<1x16xf32, #tpu.memory_space<vmem>>, %arg3: memref<16x32xf32, #tpu.memory_space<vmem>>, %arg4: memref<16x32xf32, #tpu.memory_space<vmem>>) attributes {dimension_semantics = [#tpu.dimension_semantics<parallel>], iteration_bounds = array<i64: 1>, scalar_prefetch = 0 : i64, scratch_operands = 0 : i64, tpu.core_type = #tpu.core_type<tc>, window_params = [{transform_indices = @transform_0, window_bounds = array<i64: 16, 1>}, {pipeline_mode = #tpu.pipeline_mode<synchronous>, transform_indices = @transform_1, window_bounds = array<i64: 1, 16>}, {transform_indices = @transform_2, window_bounds = array<i64: 16, 32>}, {transform_indices = @transform_3, window_bounds = array<i64: 16, 32>}]} {
    %c0 = arith.constant 0 : index
    %c0_0 = arith.constant 0 : index
    %0 = vector.load %arg1[%c0, %c0_0] : memref<16x1xf32, #tpu.memory_space<vmem>>, vector<16x1xf32>
    %c0_1 = arith.constant 0 : index
    %c0_2 = arith.constant 0 : index
    %1 = vector.load %arg2[%c0_1, %c0_2] : memref<1x16xf32, #tpu.memory_space<vmem>>, vector<1x16xf32>
    %2 = vector.broadcast %0 : vector<16x1xf32> to vector<16x16xf32>
    %3 = vector.broadcast %1 : vector<1x16xf32> to vector<16x16xf32>
    %4 = arith.mulf %2, %3 : vector<16x16xf32>
    %5 = math.cos %4 : vector<16x16xf32>
    %6 = math.sin %4 : vector<16x16xf32>
    %7 = tpu.concatenate %5, %5 in 1 : vector<16x16xf32>, vector<16x16xf32> -> vector<16x32xf32>
    %c0_3 = arith.constant 0 : index
    %c0_4 = arith.constant 0 : index
    %8 = vector.load %arg3[%c0_3, %c0_4] : memref<16x32xf32, #tpu.memory_space<vmem>>, vector<16x32xf32>
    tpu.vector_store %arg3[%c0_3, %c0_4], %7 {strides = array<i32>} : memref<16x32xf32, #tpu.memory_space<vmem>>, vector<16x32xf32>,
    %9 = tpu.concatenate %6, %6 in 1 : vector<16x16xf32>, vector<16x16xf32> -> vector<16x32xf32>
    %c0_5 = arith.constant 0 : index
    %c0_6 = arith.constant 0 : index
    %10 = vector.load %arg4[%c0_5, %c0_6] : memref<16x32xf32, #tpu.memory_space<vmem>>, vector<16x32xf32>
    tpu.vector_store %arg4[%c0_5, %c0_6], %9 {strides = array<i32>} : memref<16x32xf32, #tpu.memory_space<vmem>>, vector<16x32xf32>,
    return
  }
  func.func @transform_0(%arg0: i32) -> (i32, i32) {
    %c0_i32 = arith.constant 0 : i32
    %c0_i32_0 = arith.constant 0 : i32
    return %arg0, %c0_i32 : i32, i32
  }
  func.func @transform_1(%arg0: i32) -> (i32, i32) {
    %c0_i32 = arith.constant 0 : i32
    %c0_i32_0 = arith.constant 0 : i32
    %c0_i32_1 = arith.constant 0 : i32
    return %c0_i32, %c0_i32_0 : i32, i32
  }
  func.func @transform_2(%arg0: i32) -> (i32, i32) {
    %c0_i32 = arith.constant 0 : i32
    %c0_i32_0 = arith.constant 0 : i32
    return %arg0, %c0_i32 : i32, i32
  }
  func.func @transform_3(%arg0: i32) -> (i32, i32) {
    %c0_i32 = arith.constant 0 : i32
    %c0_i32_0 = arith.constant 0 : i32
    return %arg0, %c0_i32 : i32, i32
  }
}

</mosaic_0001>

<llo_original>
// kernel: tpu_custom_call.1
$region0: #{tpu_custom_call.1}
  #allocation0 [shape = 'u32[]', space=smem, size = 0x4, offset = 0x4, fixed_abs, tag = 'smem constant byte address 0x4 - core index']
  #allocation1 [shape = 'u32[144,128]{1,0:T(1,128)}', space=vmem, size = 0x12000, scoped, tag = 'internal scratch']
  %s0 = inlined_call_operand.vmem [shape: f32[16,1], index: 0, kind: input, shape index: {}]
  %s1 = inlined_call_operand.vmem [shape: f32[1,16], index: 1, kind: input, shape index: {}]
  %s2 = inlined_call_operand.hbm [shape: f32[16,32], index: 2, kind: output, shape index: {0}]
  %s3 = inlined_call_operand.hbm [shape: f32[16,32], index: 3, kind: output, shape index: {1}]
  %4 = xla_tuple %s2, %s3
  %s5 = sld [smem:[#allocation0]]
  $region26: #{tpu_custom_call.1} parent=0
    _
  %s7 = ssub.s32 1, %s5
  %s8 = scalar_select 0, %s7, %s5
  $region1: #{tpu_custom_call.1} parent=0
    #allocation2 [shape = 'u8[8192]{0}', space=vmem, size = 0x2000, scoped, tag = 'output window, operand 0, single buffered']
    #allocation3 [shape = 's32[1]{0}', space=sflag, size = 0x4, scoped, tag = 'scoped memory for tpu_custom_call.1']
    #allocation4 [shape = 'u8[8192]{0}', space=vmem, size = 0x2000, scoped, tag = 'output window, operand 1, single buffered']
    #allocation5 [shape = 's32[1]{0}', space=sflag, size = 0x4, scoped, tag = 'scoped memory for tpu_custom_call.1']
    %9 = vsyncpa [#allocation3], 0
    %10 = vsyncpa [#allocation5], 0
    // Predicated region
    $region2: #{tpu_custom_call.1} parent=1 // pred_check
      _
    $region3: #{tpu_custom_call.1} parent=1 // pred_check_branch
      %12 = sbr.rel (0) target = $region5
    $region4: #{tpu_custom_call.1} parent=1 // pred_region
      _
    $region5: #{tpu_custom_call.1} parent=1 // pred_fallthru
      _
    // Predicated region
    $region6: #{tpu_custom_call.1} parent=1 // pred_check
      _
    $region7: #{tpu_custom_call.1} parent=1 // pred_check_branch
      %14 = sbr.rel (0) target = $region9
    $region8: #{tpu_custom_call.1} parent=1 // pred_region
      _
    $region9: #{tpu_custom_call.1} parent=1 // pred_fallthru
      _
    %v15 = vld [vmem:[%s0] sm:$0xff]
    %v16 = vld [vmem:[%s0 + $0x8] sm:$0xff]
    %v17 = vld [vmem:[%s1] sm:$0x1]
    %19 = vset.pattern.permute.xlu0 0
    %20 = vperm.xlu0 %19, %v15
    %v21 = vpop.permute.xlu0 %20
    %24 = vset.pattern.permute.xlu0 0
    %25 = vperm.xlu0 %24, %v16
    %v26 = vpop.permute.xlu0 %25
    %v29 = vlaneseq
    %v30 = vshrl.u32 %v29, 7
    %v31 = vsub.s32 0, %v30
    %v32 = vrot.slane %v17, %v31
    %v34 = vmul.f32 %v21, %v32
    %v35 = vmul.f32 %v26, %v32
    %v36 = vand.u32 2147483647, %v34
    %vm37 = vcmp.le.f32.partialorder %v36, 0.7853982
    %vm38 = vcmp.lt.s32.totalorder %v34, 0
    %v39 = vand.u32 %v34, 2139095040
    %v40 = vshrl.u32 %v39, 23
    %v41 = vsub.s32 %v40, 127
    %v42 = vand.u32 2147483647, %v34
    %v43 = vand.u32 %v42, 8388607
    %v44 = vor.u32 %v43, 8388608
    %v45 = vsub.s32 0, %v44
    %v46 = vadd.s32 %v41, 1
    %vm47 = vcmp.gt.s32.totalorder %v46, 0
    %v48 = vsel %vm47, %v46, 0
    %v49 = vshrl.u32 %v48, 5
    %v50 = vand.u32 %v48, 31
    %v51 = vsub.s32 32, %v50
    %v52 = vshrl.u32 683565275, %v51
    %v53 = vshll.u32 683565275, %v50
    %v54 = vshrl.u32 2475754826, %v51
    %v55 = vor.u32 %v53, %v54
    %v56 = vshll.u32 2475754826, %v50
    %v57 = vshrl.u32 2131351028, %v51
    %v58 = vor.u32 %v56, %v57
    %v59 = vshll.u32 2131351028, %v50
    %v60 = vshrl.u32 2102212464, %v51
    %v61 = vor.u32 %v59, %v60
    %v62 = vshll.u32 2102212464, %v50
    %v63 = vshrl.u32 920167782, %v51
    %v64 = vor.u32 %v62, %v63
    %v65 = vshll.u32 920167782, %v50
    %v66 = vshrl.u32 1326507024, %v51
    %v67 = vor.u32 %v65, %v66
    %vm68 = vcmp.lt.s32.totalorder %v49, 1
    %vm69 = vcmp.lt.s32.totalorder %v49, 2
    %vm70 = vcmp.lt.s32.totalorder %v49, 3
    %vm71 = vcmp.lt.s32.totalorder %v49, 4
    %v72 = vsel %vm68, %v52, %v55
    %v73 = vsel %vm71, %v61, 2102212464
    %v74 = vsel %vm70, %v58, %v73
    %v75 = vsel %vm69, %v72, %v74
    %v76 = vsel %vm68, %v55, %v58
    %v77 = vsel %vm71, %v64, 920167782
    %v78 = vsel %vm70, %v61, %v77
    %v79 = vsel %vm69, %v76, %v78
    %v80 = vsel %vm68, %v58, %v61
    %v81 = vsel %vm71, %v67, 1326507024
    %v82 = vsel %vm70, %v64, %v81
    %v83 = vsel %vm69, %v80, %v82
    %v84 = vshll.u32 %v44, 8
    %v85 = vmul.u32.u64.compose %v84, %v83
    %v86 = vextract.low.u32 %v85
    %v87 = vextract.high.u32 %v85
    %v88 = vmul.u32.u64.compose %v84, %v79
    %v89 = vextract.low.u32 %v88
    %v90 = vextract.high.u32 %v88
    %v91 = vmul.u32 %v84, %v75
    %v92 = vadd.s32 %v87, %v89
    %vm93 = vc.u32 %v87, %v89
    %v94 = vadd.s32 %v90, 1
    %v95 = vsel %vm93, %v94, %v90
    %v96 = vadd.s32 %v91, %v95
    %v97 = vadd.s32 %v96, 536870912
    %v98 = vshrl.u32 %v97, 30
    %v99 = vshll.u32 %v98, 30
    %v100 = vsub.s32 %v96, %v99
    %vm101 = vcmp.lt.s32.totalorder %v100, 0
    %v102 = vsub.s32 0, %v100
    %v103 = vsel %vm101, %v102, %v100
    %v104 = vclz %v103
    %v105 = vsub.s32 %v104, 2
    %vm106 = vcmp.gt.s32.totalorder 0, %v105
    %v107 = vsel %vm106, 0, %v105
    %v108 = vsub.s32 32, %v107
    %v109 = vshll.u32 %v100, %v107
    %v110 = vshrl.u32 %v92, %v108
    %v111 = vor.u32 %v109, %v110
    %v112 = vsub.s32 4294967266, %v107
    %v113 = vadd.s32 %v112, 127
    %v114 = vshll.u32 %v113, 23
    %v115 = vor.u32 4788187, %v114
    %v116 = vand.u32 2147483647, %v115
    %v118 = vcvt.s32.f32 %v111
    %v119 = vmul.f32 %v118, %v116
    %v120 = vxor.u32 %v119, 2147483648
    %v121 = vsel %vm38, %v120, %v119
    %v122 = vsub.s32 4, %v98
    %v123 = vsel %vm38, %v122, %v98
    %v124 = vsel %vm37, %v34, %v121
    %v125 = vsel %vm37, 0, %v123
    %v126 = vcosq.f32.pop %v124
    %v127 = vsinq.f32.pop %v124
    %vm128 = vweird.f32 %v34
    %v129 = vand.u32 %v125, 3
    %vm130 = vcmp.lt.s32.totalorder %v129, 2
    %vm131 = vcmp.eq.s32.totalorder %v129, 0
    %v132 = vxor.u32 %v127, 2147483648
    %v133 = vsel %vm131, %v126, %v132
    %vm134 = vcmp.eq.s32.totalorder %v129, 2
    %v135 = vxor.u32 %v126, 2147483648
    %v136 = vsel %vm134, %v135, %v127
    %v137 = vsel %vm130, %v133, %v136
    %v138 = vsel %vm128, nan, %v137
    %v139 = vand.u32 2147483647, %v35
    %vm140 = vcmp.le.f32.partialorder %v139, 0.7853982
    %vm141 = vcmp.lt.s32.totalorder %v35, 0
    %v142 = vand.u32 %v35, 2139095040
    %v143 = vshrl.u32 %v142, 23
    %v144 = vsub.s32 %v143, 127
    %v145 = vand.u32 2147483647, %v35
    %v146 = vand.u32 %v145, 8388607
    %v147 = vor.u32 %v146, 8388608
    %v148 = vsub.s32 0, %v147
    %v149 = vadd.s32 %v144, 1
    %vm150 = vcmp.gt.s32.totalorder %v149, 0
    %v151 = vsel %vm150, %v149, 0
    %v152 = vshrl.u32 %v151, 5
    %v153 = vand.u32 %v151, 31
    %v154 = vsub.s32 32, %v153
    %v155 = vshrl.u32 683565275, %v154
    %v156 = vshll.u32 683565275, %v153
    %v157 = vshrl.u32 2475754826, %v154
    %v158 = vor.u32 %v156, %v157
    %v159 = vshll.u32 2475754826, %v153
    %v160 = vshrl.u32 2131351028, %v154
    %v161 = vor.u32 %v159, %v160
    %v162 = vshll.u32 2131351028, %v153
    %v163 = vshrl.u32 2102212464, %v154
    %v164 = vor.u32 %v162, %v163
    %v165 = vshll.u32 2102212464, %v153
    %v166 = vshrl.u32 920167782, %v154
    %v167 = vor.u32 %v165, %v166
    %v168 = vshll.u32 920167782, %v153
    %v169 = vshrl.u32 1326507024, %v154
    %v170 = vor.u32 %v168, %v169
    %vm171 = vcmp.lt.s32.totalorder %v152, 1
    %vm172 = vcmp.lt.s32.totalorder %v152, 2
    %vm173 = vcmp.lt.s32.totalorder %v152, 3
    %vm174 = vcmp.lt.s32.totalorder %v152, 4
    %v175 = vsel %vm171, %v155, %v158
    %v176 = vsel %vm174, %v164, 2102212464
    %v177 = vsel %vm173, %v161, %v176
    %v178 = vsel %vm172, %v175, %v177
    %v179 = vsel %vm171, %v158, %v161
    %v180 = vsel %vm174, %v167, 920167782
    %v181 = vsel %vm173, %v164, %v180
    %v182 = vsel %vm172, %v179, %v181
    %v183 = vsel %vm171, %v161, %v164
    %v184 = vsel %vm174, %v170, 1326507024
    %v185 = vsel %vm173, %v167, %v184
    %v186 = vsel %vm172, %v183, %v185
    %v187 = vshll.u32 %v147, 8
    %v188 = vmul.u32.u64.compose %v187, %v186
    %v189 = vextract.low.u32 %v188
    %v190 = vextract.high.u32 %v188
    %v191 = vmul.u32.u64.compose %v187, %v182
    %v192 = vextract.low.u32 %v191
    %v193 = vextract.high.u32 %v191
    %v194 = vmul.u32 %v187, %v178
    %v195 = vadd.s32 %v190, %v192
    %vm196 = vc.u32 %v190, %v192
    %v197 = vadd.s32 %v193, 1
    %v198 = vsel %vm196, %v197, %v193
    %v199 = vadd.s32 %v194, %v198
    %v200 = vadd.s32 %v199, 536870912
    %v201 = vshrl.u32 %v200, 30
    %v202 = vshll.u32 %v201, 30
    %v203 = vsub.s32 %v199, %v202
    %vm204 = vcmp.lt.s32.totalorder %v203, 0
    %v205 = vsub.s32 0, %v203
    %v206 = vsel %vm204, %v205, %v203
    %v207 = vclz %v206
    %v208 = vsub.s32 %v207, 2
    %vm209 = vcmp.gt.s32.totalorder 0, %v208
    %v210 = vsel %vm209, 0, %v208
    %v211 = vsub.s32 32, %v210
    %v212 = vshll.u32 %v203, %v210
    %v213 = vshrl.u32 %v195, %v211
    %v214 = vor.u32 %v212, %v213
    %v215 = vsub.s32 4294967266, %v210
    %v216 = vadd.s32 %v215, 127
    %v217 = vshll.u32 %v216, 23
    %v218 = vor.u32 4788187, %v217
    %v219 = vand.u32 2147483647, %v218
    %v221 = vcvt.s32.f32 %v214
    %v222 = vmul.f32 %v221, %v219
    %v223 = vxor.u32 %v222, 2147483648
    %v224 = vsel %vm141, %v223, %v222
    %v225 = vsub.s32 4, %v201
    %v226 = vsel %vm141, %v225, %v201
    %v227 = vsel %vm140, %v35, %v224
    %v228 = vsel %vm140, 0, %v226
    %v229 = vcosq.f32.pop %v227
    %v230 = vsinq.f32.pop %v227
    %vm231 = vweird.f32 %v35
    %v232 = vand.u32 %v228, 3
    %vm233 = vcmp.lt.s32.totalorder %v232, 2
    %vm234 = vcmp.eq.s32.totalorder %v232, 0
    %v235 = vxor.u32 %v230, 2147483648
    %v236 = vsel %vm234, %v229, %v235
    %vm237 = vcmp.eq.s32.totalorder %v232, 2
    %v238 = vxor.u32 %v229, 2147483648
    %v239 = vsel %vm237, %v238, %v230
    %v240 = vsel %vm233, %v236, %v239
    %v241 = vsel %vm231, nan, %v240
    %v242 = vand.u32 2147483647, %v34
    %vm243 = vcmp.le.f32.partialorder %v242, 0.7853982
    %vm244 = vcmp.lt.s32.totalorder %v34, 0
    %v245 = vand.u32 %v34, 2139095040
    %v246 = vshrl.u32 %v245, 23
    %v247 = vsub.s32 %v246, 127
    %v248 = vand.u32 2147483647, %v34
    %v249 = vand.u32 %v248, 8388607
    %v250 = vor.u32 %v249, 8388608
    %v251 = vsub.s32 0, %v250
    %v252 = vadd.s32 %v247, 1
    %vm253 = vcmp.gt.s32.totalorder %v252, 0
    %v254 = vsel %vm253, %v252, 0
    %v255 = vshrl.u32 %v254, 5
    %v256 = vand.u32 %v254, 31
    %v257 = vsub.s32 32, %v256
    %v258 = vshrl.u32 683565275, %v257
    %v259 = vshll.u32 683565275, %v256
    %v260 = vshrl.u32 2475754826, %v257
    %v261 = vor.u32 %v259, %v260
    %v262 = vshll.u32 2475754826, %v256
    %v263 = vshrl.u32 2131351028, %v257
    %v264 = vor.u32 %v262, %v263
    %v265 = vshll.u32 2131351028, %v256
    %v266 = vshrl.u32 2102212464, %v257
    %v267 = vor.u32 %v265, %v266
    %v268 = vshll.u32 2102212464, %v256
    %v269 = vshrl.u32 920167782, %v257
    %v270 = vor.u32 %v268, %v269
    %v271 = vshll.u32 920167782, %v256
    %v272 = vshrl.u32 1326507024, %v257
    %v273 = vor.u32 %v271, %v272
    %vm274 = vcmp.lt.s32.totalorder %v255, 1
    %vm275 = vcmp.lt.s32.totalorder %v255, 2
    %vm276 = vcmp.lt.s32.totalorder %v255, 3
    %vm277 = vcmp.lt.s32.totalorder %v255, 4
    %v278 = vsel %vm274, %v258, %v261
    %v279 = vsel %vm277, %v267, 2102212464
    %v280 = vsel %vm276, %v264, %v279
    %v281 = vsel %vm275, %v278, %v280
    %v282 = vsel %vm274, %v261, %v264
    %v283 = vsel %vm277, %v270, 920167782
    %v284 = vsel %vm276, %v267, %v283
    %v285 = vsel %vm275, %v282, %v284
    %v286 = vsel %vm274, %v264, %v267
    %v287 = vsel %vm277, %v273, 1326507024
    %v288 = vsel %vm276, %v270, %v287
    %v289 = vsel %vm275, %v286, %v288
    %v290 = vshll.u32 %v250, 8
    %v291 = vmul.u32.u64.compose %v290, %v289
    %v292 = vextract.low.u32 %v291
    %v293 = vextract.high.u32 %v291
    %v294 = vmul.u32.u64.compose %v290, %v285
    %v295 = vextract.low.u32 %v294
    %v296 = vextract.high.u32 %v294
    %v297 = vmul.u32 %v290, %v281
    %v298 = vadd.s32 %v293, %v295
    %vm299 = vc.u32 %v293, %v295
    %v300 = vadd.s32 %v296, 1
    %v301 = vsel %vm299, %v300, %v296
    %v302 = vadd.s32 %v297, %v301
    %v303 = vadd.s32 %v302, 536870912
    %v304 = vshrl.u32 %v303, 30
    %v305 = vshll.u32 %v304, 30
    %v306 = vsub.s32 %v302, %v305
    %vm307 = vcmp.lt.s32.totalorder %v306, 0
    %v308 = vsub.s32 0, %v306
    %v309 = vsel %vm307, %v308, %v306
    %v310 = vclz %v309
    %v311 = vsub.s32 %v310, 2
    %vm312 = vcmp.gt.s32.totalorder 0, %v311
    %v313 = vsel %vm312, 0, %v311
    %v314 = vsub.s32 32, %v313
    %v315 = vshll.u32 %v306, %v313
    %v316 = vshrl.u32 %v298, %v314
    %v317 = vor.u32 %v315, %v316
    %v318 = vsub.s32 4294967266, %v313
    %v319 = vadd.s32 %v318, 127
    %v320 = vshll.u32 %v319, 23
    %v321 = vor.u32 4788187, %v320
    %v322 = vand.u32 2147483647, %v321
    %v324 = vcvt.s32.f32 %v317
    %v325 = vmul.f32 %v324, %v322
    %v326 = vxor.u32 %v325, 2147483648
    %v327 = vsel %vm244, %v326, %v325
    %v328 = vsub.s32 4, %v304
    %v329 = vsel %vm244, %v328, %v304
    %v330 = vsel %vm243, %v34, %v327
    %v331 = vsel %vm243, 0, %v329
    %v332 = vcosq.f32.pop %v330
    %v333 = vsinq.f32.pop %v330
    %vm334 = vweird.f32 %v34
    %v335 = vadd.s32 %v331, 3
    %v336 = vand.u32 %v335, 3
    %vm337 = vcmp.lt.s32.totalorder %v336, 2
    %vm338 = vcmp.eq.s32.totalorder %v336, 0
    %v339 = vxor.u32 %v333, 2147483648
    %v340 = vsel %vm338, %v332, %v339
    %vm341 = vcmp.eq.s32.totalorder %v336, 2
    %v342 = vxor.u32 %v332, 2147483648
    %v343 = vsel %vm341, %v342, %v333
    %v344 = vsel %vm337, %v340, %v343
    %v345 = vsel %vm334, nan, %v344
    %v346 = vand.u32 2147483647, %v35
    %vm347 = vcmp.le.f32.partialorder %v346, 0.7853982
    %vm348 = vcmp.lt.s32.totalorder %v35, 0
    %v349 = vand.u32 %v35, 2139095040
    %v350 = vshrl.u32 %v349, 23
    %v351 = vsub.s32 %v350, 127
    %v352 = vand.u32 2147483647, %v35
    %v353 = vand.u32 %v352, 8388607
    %v354 = vor.u32 %v353, 8388608
    %v355 = vsub.s32 0, %v354
    %v356 = vadd.s32 %v351, 1
    %vm357 = vcmp.gt.s32.totalorder %v356, 0
    %v358 = vsel %vm357, %v356, 0
    %v359 = vshrl.u32 %v358, 5
    %v360 = vand.u32 %v358, 31
    %v361 = vsub.s32 32, %v360
    %v362 = vshrl.u32 683565275, %v361
    %v363 = vshll.u32 683565275, %v360
    %v364 = vshrl.u32 2475754826, %v361
    %v365 = vor.u32 %v363, %v364
    %v366 = vshll.u32 2475754826, %v360
    %v367 = vshrl.u32 2131351028, %v361
    %v368 = vor.u32 %v366, %v367
    %v369 = vshll.u32 2131351028, %v360
    %v370 = vshrl.u32 2102212464, %v361
    %v371 = vor.u32 %v369, %v370
    %v372 = vshll.u32 2102212464, %v360
    %v373 = vshrl.u32 920167782, %v361
    %v374 = vor.u32 %v372, %v373
    %v375 = vshll.u32 920167782, %v360
    %v376 = vshrl.u32 1326507024, %v361
    %v377 = vor.u32 %v375, %v376
    %vm378 = vcmp.lt.s32.totalorder %v359, 1
    %vm379 = vcmp.lt.s32.totalorder %v359, 2
    %vm380 = vcmp.lt.s32.totalorder %v359, 3
    %vm381 = vcmp.lt.s32.totalorder %v359, 4
    %v382 = vsel %vm378, %v362, %v365
    %v383 = vsel %vm381, %v371, 2102212464
    %v384 = vsel %vm380, %v368, %v383
    %v385 = vsel %vm379, %v382, %v384
    %v386 = vsel %vm378, %v365, %v368
    %v387 = vsel %vm381, %v374, 920167782
    %v388 = vsel %vm380, %v371, %v387
    %v389 = vsel %vm379, %v386, %v388
    %v390 = vsel %vm378, %v368, %v371
    %v391 = vsel %vm381, %v377, 1326507024
    %v392 = vsel %vm380, %v374, %v391
    %v393 = vsel %vm379, %v390, %v392
    %v394 = vshll.u32 %v354, 8
    %v395 = vmul.u32.u64.compose %v394, %v393
    %v396 = vextract.low.u32 %v395
    %v397 = vextract.high.u32 %v395
    %v398 = vmul.u32.u64.compose %v394, %v389
    %v399 = vextract.low.u32 %v398
    %v400 = vextract.high.u32 %v398
    %v401 = vmul.u32 %v394, %v385
    %v402 = vadd.s32 %v397, %v399
    %vm403 = vc.u32 %v397, %v399
    %v404 = vadd.s32 %v400, 1
    %v405 = vsel %vm403, %v404, %v400
    %v406 = vadd.s32 %v401, %v405
    %v407 = vadd.s32 %v406, 536870912
    %v408 = vshrl.u32 %v407, 30
    %v409 = vshll.u32 %v408, 30
    %v410 = vsub.s32 %v406, %v409
    %vm411 = vcmp.lt.s32.totalorder %v410, 0
    %v412 = vsub.s32 0, %v410
    %v413 = vsel %vm411, %v412, %v410
    %v414 = vclz %v413
    %v415 = vsub.s32 %v414, 2
    %vm416 = vcmp.gt.s32.totalorder 0, %v415
    %v417 = vsel %vm416, 0, %v415
    %v418 = vsub.s32 32, %v417
    %v419 = vshll.u32 %v410, %v417
    %v420 = vshrl.u32 %v402, %v418
    %v421 = vor.u32 %v419, %v420
    %v422 = vsub.s32 4294967266, %v417
    %v423 = vadd.s32 %v422, 127
    %v424 = vshll.u32 %v423, 23
    %v425 = vor.u32 4788187, %v424
    %v426 = vand.u32 2147483647, %v425
    %v428 = vcvt.s32.f32 %v421
    %v429 = vmul.f32 %v428, %v426
    %v430 = vxor.u32 %v429, 2147483648
    %v431 = vsel %vm348, %v430, %v429
    %v432 = vsub.s32 4, %v408
    %v433 = vsel %vm348, %v432, %v408
    %v434 = vsel %vm347, %v35, %v431
    %v435 = vsel %vm347, 0, %v433
    %v436 = vcosq.f32.pop %v434
    %v437 = vsinq.f32.pop %v434
    %vm438 = vweird.f32 %v35
    %v439 = vadd.s32 %v435, 3
    %v440 = vand.u32 %v439, 3
    %vm441 = vcmp.lt.s32.totalorder %v440, 2
    %vm442 = vcmp.eq.s32.totalorder %v440, 0
    %v443 = vxor.u32 %v437, 2147483648
    %v444 = vsel %vm442, %v436, %v443
    %vm445 = vcmp.eq.s32.totalorder %v440, 2
    %v446 = vxor.u32 %v436, 2147483648
    %v447 = vsel %vm445, %v446, %v437
    %v448 = vsel %vm441, %v444, %v447
    %v449 = vsel %vm438, nan, %v448
    %452 = vrot.lane.b32.xlu0 %v138, 16
    %v453 = vpop.permute.xlu0 %452
    %454 = vrot.lane.b32.xlu0 %v241, 16
    %v455 = vpop.permute.xlu0 %454
    %vm458 = vcmask 130048
    %v459 = vsel %vm458, %v138, %v453
    %v460 = vsel %vm458, %v241, %v455
    %vm461 = vcmask 261120
    %462 = vst.msk [vmem:[#allocation2] sm:$0xff] %vm461, %v459
    %463 = vst.msk [vmem:[#allocation2 + $0x8] sm:$0xff] %vm461, %v460
    %466 = vrot.lane.b32.xlu0 %v345, 16
    %v467 = vpop.permute.xlu0 %466
    %468 = vrot.lane.b32.xlu0 %v449, 16
    %v469 = vpop.permute.xlu0 %468
    %v472 = vsel %vm458, %v345, %v467
    %v473 = vsel %vm458, %v449, %v469
    %474 = vst.msk [vmem:[#allocation4] sm:$0xff] %vm461, %v472
    %475 = vst.msk [vmem:[#allocation4 + $0x8] sm:$0xff] %vm461, %v473
    // Predicated region
    $region10: #{tpu_custom_call.1} parent=1 // pred_check
      _
    $region11: #{tpu_custom_call.1} parent=1 // pred_check_branch
      %477 = sbr.rel (0) target = $region13
    $region12: #{tpu_custom_call.1} parent=1 // pred_region
      %s479 = ssub.s32 256, 256
      %480 = vsyncadd [#allocation3], %s479
      %s481 = sshll.u32 [#allocation2], 4
      %s482 = int_to_ptr.vmem [resolvable:$true] %s481
      %487 = dma.vmem_to_hbm [thread:$0]  %s482, 256, %s2, [#allocation3], 128, 128, 8
    $region13: #{tpu_custom_call.1} parent=1 // pred_fallthru
      _
    // Predicated region
    $region14: #{tpu_custom_call.1} parent=1 // pred_check
      _
    $region15: #{tpu_custom_call.1} parent=1 // pred_check_branch
      %489 = sbr.rel (0) target = $region17
    $region16: #{tpu_custom_call.1} parent=1 // pred_region
      %s491 = ssub.s32 256, 256
      %492 = vsyncadd [#allocation5], %s491
      %s493 = sshll.u32 [#allocation4], 4
      %s494 = int_to_ptr.vmem [resolvable:$true] %s493
      %499 = dma.vmem_to_hbm [thread:$0]  %s494, 256, %s3, [#allocation5], 128, 128, 8
    $region17: #{tpu_custom_call.1} parent=1 // pred_fallthru
      _
    // Predicated region
    $region18: #{tpu_custom_call.1} parent=1 // pred_check
      _
    $region19: #{tpu_custom_call.1} parent=1 // pred_check_branch
      %501 = sbr.rel (0) target = $region21
    $region20: #{tpu_custom_call.1} parent=1 // pred_region
      %502 = dma.done [#allocation3], 256
    $region21: #{tpu_custom_call.1} parent=1 // pred_fallthru
      _
    // Predicated region
    $region22: #{tpu_custom_call.1} parent=1 // pred_check
      _
    $region23: #{tpu_custom_call.1} parent=1 // pred_check_branch
      %504 = sbr.rel (0) target = $region25
    $region24: #{tpu_custom_call.1} parent=1 // pred_region
      %505 = dma.done [#allocation5], 256
    $region25: #{tpu_custom_call.1} parent=1 // pred_fallthru
      _
    %506 = vsyncpa [#allocation3], 1
    %507 = vsyncpa [#allocation5], 1

</llo_original>
